<compile_context>
chip_gen: v5e
topology: v5e:2x2
jax: 0.10.0
libtpu: 0.0.40
codegen_flags: <defaults>
</compile_context>

<pallas_src>
import functools

import jax
import jax.numpy as jnp
from jax.experimental import pallas as pl
from jax.experimental.pallas import tpu as pltpu


def _round_up(x, m):
    return ((x + m - 1) // m) * m


def bert_emo_head_kernel(seq_ref, mask_ref, emo_ref, wsem_ref, wemo_ref, b_ref,
                         o_ref, acc_ref):
    # seq_ref : (tB, tL, H)   BERT sequence output tile (bf16 or f32), streamed
    # mask_ref: (tB, tL)      per-token pooling weights (f32 in HBM)
    # emo_ref : (tB, E)       emotion features (f32)
    # wsem_ref: (H, O_pad)    fc weight slice for semantic part (transposed)
    # wemo_ref: (E, O_pad)    fc weight slice for emotion part (transposed)
    # b_ref   : (1, O_pad)    fc bias
    # o_ref   : (tB, O_pad)   output tile
    # acc_ref : (tB, 1, H) f32  pooled-sum accumulator (VMEM scratch)
    l = pl.program_id(1)

    @pl.when(l == 0)
    def _init():
        acc_ref[...] = jnp.zeros_like(acc_ref)

    # Mask-weighted reduction over this L-tile as a batched matmul on the MXU:
    #   (tB, 1, tL) @ (tB, tL, H) -> (tB, 1, H), f32 accumulation.
    # The tiny mask tile is cast once to the seq dtype (bf16 on the real path);
    # the big seq tile is consumed directly (no full-tile f32 upcast on VPU).
    seq = seq_ref[...]                                  # (tB, tL, H)
    mask = mask_ref[...].astype(seq.dtype)              # (tB, tL)
    part = jnp.einsum('bql,blh->bqh', mask[:, None, :], seq,
                      preferred_element_type=jnp.float32)
    acc_ref[...] += part

    # Finalize: tiny fc matmul + bias, exactly once per batch tile.
    @pl.when(l == pl.num_programs(1) - 1)
    def _finalize():
        pooled = acc_ref[...][:, 0, :]                  # (tB, H) f32
        out = jnp.dot(pooled, wsem_ref[...], preferred_element_type=jnp.float32)
        out = out + jnp.dot(emo_ref[...], wemo_ref[...],
                            preferred_element_type=jnp.float32)
        out = out + b_ref[...]
        o_ref[...] = out.astype(o_ref.dtype)


@functools.partial(jax.jit, static_argnames=("block_b", "block_l"))
def bert_emo_head(seq_output, mask, emotion, w_sem, w_emo, bias,
                  block_b: int = 16, block_l: int = 512):
    """out = concat([sum_l mask*seq, emotion]) @ W_full^T + b.

    W_full is passed pre-split / pre-transposed as w_sem (H, O) and
    w_emo (E, O), which is mathematically identical to fc(concat(...)).
    """
    B, L, H = seq_output.shape
    E = emotion.shape[1]
    O = w_sem.shape[1]

    # ---- layout / tile selection (avoid padding whenever shapes allow) ----
    O_pad = _round_up(O, 128)          # lane-dense output store
    H_pad = _round_up(H, 128)          # H is the lane axis of seq tiles;
                                       # real BERT H=768 needs no padding.

    # L tile: multiple of 128, as large as requested, preferring an exact
    # divisor of L so seq_output / mask are passed through with NO padded copy.
    tl = min(_round_up(block_l, 128), _round_up(L, 128))
    if L % 128 == 0:
        while tl > 128 and L % tl != 0:
            tl -= 128
    L_pad = _round_up(L, tl)

    # Batch tile: full B for small batches; otherwise a multiple of 8 that
    # divides B.  With the default block_b=16 a batch of 32 gives grid[0]=2,
    # so the "parallel" axis shards across the two v7x TensorCores.
    if B <= block_b:
        tb = B
    else:
        tb = max((min(block_b, B) // 8) * 8, 8)
        while tb > 8 and B % tb != 0:
            tb -= 8
    B_pad = _round_up(B, tb)

    # ---- padding only when actually needed (big arrays pass straight through)
    seq_p = seq_output
    if (B_pad, L_pad, H_pad) != (B, L, H):
        seq_p = jnp.pad(seq_output,
                        ((0, B_pad - B), (0, L_pad - L), (0, H_pad - H)))
    mask_p = mask.astype(jnp.float32)
    if (B_pad, L_pad) != (B, L):
        mask_p = jnp.pad(mask_p, ((0, B_pad - B), (0, L_pad - L)))
    emo_p = emotion.astype(jnp.float32)
    if B_pad != B:
        emo_p = jnp.pad(emo_p, ((0, B_pad - B), (0, 0)))

    # Tiny weight / bias operands: pad once (negligible), stay VMEM-resident.
    wsem_p = jnp.zeros((H_pad, O_pad), jnp.float32).at[:H, :O].set(
        w_sem.astype(jnp.float32))
    wemo_p = jnp.zeros((E, O_pad), jnp.float32).at[:, :O].set(
        w_emo.astype(jnp.float32))
    bias_p = jnp.zeros((1, O_pad), jnp.float32).at[0, :O].set(
        bias.astype(jnp.float32))

    grid = (B_pad // tb, L_pad // tl)

    # Explicit VMEM budget: v5e's default scoped limit (16 MiB) is too small
    # for double-buffered 512-long seq tiles; v6e/v7x defaults are 32 MiB.
    seq_itemsize = jnp.dtype(seq_output.dtype).itemsize
    est = 2 * tb * tl * H_pad * seq_itemsize          # double-buffered seq
    est += 2 * tb * tl * 4                            # mask tiles
    est += 2 * tb * E * 4                             # emotion
    est += 2 * (H_pad * O_pad + E * O_pad + O_pad) * 4  # weights + bias
    est += 2 * tb * O_pad * 4                         # output tile
    est += tb * H_pad * 4                             # f32 accumulator scratch
    vmem_limit = min(max(int(est * 1.25) + (4 << 20), 16 << 20), 64 << 20)

    out_padded = pl.pallas_call(
        bert_emo_head_kernel,
        out_shape=jax.ShapeDtypeStruct((B_pad, O_pad), jnp.float32),
        grid_spec=pltpu.PrefetchScalarGridSpec(
            num_scalar_prefetch=0,
            grid=grid,
            in_specs=[
                pl.BlockSpec((tb, tl, H_pad), lambda b, l: (b, l, 0)),  # seq (streamed)
                pl.BlockSpec((tb, tl), lambda b, l: (b, l)),            # mask tiles
                pl.BlockSpec((tb, E), lambda b, l: (b, 0)),             # emotion (per-b resident)
                pl.BlockSpec((H_pad, O_pad), lambda b, l: (0, 0)),      # W_sem (resident)
                pl.BlockSpec((E, O_pad), lambda b, l: (0, 0)),          # W_emo (resident)
                pl.BlockSpec((1, O_pad), lambda b, l: (0, 0)),          # bias (resident)
            ],
            out_specs=pl.BlockSpec((tb, O_pad), lambda b, l: (b, 0)),
            scratch_shapes=[pltpu.VMEM((tb, 1, H_pad), jnp.float32)],
        ),
        compiler_params=pltpu.CompilerParams(
            dimension_semantics=("parallel", "arbitrary"),
            vmem_limit_bytes=vmem_limit),
    )(seq_p, mask_p, emo_p, wsem_p, wemo_p, bias_p)

    return out_padded[:B, :O]


def make_encode_mask(doc_lens, maxlen):
    """Reproduce BERT_Emo._encode mask semantics:
    first (len(doc)+2) positions get weight 1/(len(doc)+2), rest 0."""
    rows = []
    for dl in doc_lens:
        valid = dl + 2  # [CLS] + doc + [SEP]
        w = jnp.where(jnp.arange(maxlen) < valid, 1.0 / valid, 0.0)
        rows.append(w)
    return jnp.stack(rows).astype(jnp.float32)


if __name__ == "__main__":
    # Small shapes consistent with the forward pass (real BERT would be
    # L<=512, H=768).  H is kept a multiple of 128 (the lane axis), and
    # block_l=128 with L=256 exercises two reduction steps.
    B = 2           # batch
    L = 256         # self.maxlen (sequence length fed to BERT)
    H = 128         # args.bert_hidden_dim
    E = 16          # args.bert_emotion_dim
    O = 8           # args.output_dim_of_pattern_based_model

    key = jax.random.PRNGKey(0)
    k_seq, k_emo, k_w, k_b = jax.random.split(key, 4)

    # Stand-in for BertModel(input_ids) sequence output (bf16, as BERT emits).
    seq_output = jax.random.normal(k_seq, (B, L, H), dtype=jnp.float32).astype(jnp.bfloat16)
    # Emotion features (dataset.BERT_Emo_features[idxs]).
    emotion = jax.random.normal(k_emo, (B, E), dtype=jnp.float32)
    # Pooling mask from _encode (doc lengths 10 and 6).
    mask = make_encode_mask([10, 6], L)

    # fc = nn.Linear(H + E, O): weight (O, H+E), bias (O,), deterministic init.
    w_full = jax.random.normal(k_w, (O, H + E), dtype=jnp.float32) * 0.02
    bias = jax.random.normal(k_b, (O,), dtype=jnp.float32) * 0.02
    w_sem = w_full[:, :H].T   # (H, O)
    w_emo = w_full[:, H:].T   # (E, O)

    out = bert_emo_head(seq_output, mask, emotion, w_sem, w_emo, bias,
                        block_b=8, block_l=128)
    out = jax.block_until_ready(out)

    # Pure-JAX reference matching the kernel's committed numerics:
    # bf16 seq, bf16-rounded pooling weights, f32 accumulation and f32 fc.
    seq_f32 = seq_output.astype(jnp.float32)
    mask_bf = mask.astype(jnp.bfloat16).astype(jnp.float32)
    pooled_ref = jnp.sum(mask_bf[:, :, None] * seq_f32, axis=1)
    ref = jnp.concatenate([pooled_ref, emotion], axis=1) @ w_full.T + bias
    assert out.shape == (B, O)
    assert jnp.allclose(out, ref, atol=5e-3, rtol=5e-3), \
        f"max abs err {jnp.max(jnp.abs(out - ref))}"

    print("KERNEL_OK")
</pallas_src>

<mosaic_0001>
module attributes {stable_mosaic.version = 11 : i64} {
  func.func @bert_emo_head_kernel(%arg0: i32, %arg1: i32, %arg2: memref<2x128x128xbf16, #tpu.memory_space<vmem>>, %arg3: memref<2x128xf32, #tpu.memory_space<vmem>>, %arg4: memref<2x16xf32, #tpu.memory_space<vmem>>, %arg5: memref<128x128xf32, #tpu.memory_space<vmem>>, %arg6: memref<16x128xf32, #tpu.memory_space<vmem>>, %arg7: memref<1x128xf32, #tpu.memory_space<vmem>>, %arg8: memref<2x128xf32, #tpu.memory_space<vmem>>, %arg9: memref<2x1x128xf32, #tpu.memory_space<vmem>>) attributes {dimension_semantics = [#tpu.dimension_semantics<parallel>, #tpu.dimension_semantics<arbitrary>], iteration_bounds = array<i64: 1, 2>, scalar_prefetch = 0 : i64, scratch_operands = 1 : i64, tpu.core_type = #tpu.core_type<tc>, window_params = [{transform_indices = @transform_0, window_bounds = array<i64: 2, 128, 128>}, {transform_indices = @transform_1, window_bounds = array<i64: 2, 128>}, {transform_indices = @transform_2, window_bounds = array<i64: 2, 16>}, {pipeline_mode = #tpu.pipeline_mode<synchronous>, transform_indices = @transform_3, window_bounds = array<i64: 128, 128>}, {pipeline_mode = #tpu.pipeline_mode<synchronous>, transform_indices = @transform_4, window_bounds = array<i64: 16, 128>}, {pipeline_mode = #tpu.pipeline_mode<synchronous>, transform_indices = @transform_5, window_bounds = array<i64: 1, 128>}, {transform_indices = @transform_6, window_bounds = array<i64: 2, 128>}]} {
    %c0_i32 = arith.constant 0 : i32
    %0 = arith.cmpi eq, %arg1, %c0_i32 : i32
    %1 = arith.extui %0 : i1 to i32
    %c0_i32_0 = arith.constant 0 : i32
    %2 = arith.cmpi ne, %1, %c0_i32_0 : i32
    scf.if %2 {
      %cst_12 = arith.constant 0.000000e+00 : f32
      %14 = vector.broadcast %cst_12 : f32 to vector<2x1x128xf32>
      %c0_13 = arith.constant 0 : index
      %c0_14 = arith.constant 0 : index
      %c0_15 = arith.constant 0 : index
      %15 = vector.load %arg9[%c0_13, %c0_14, %c0_15] : memref<2x1x128xf32, #tpu.memory_space<vmem>>, vector<2x1x128xf32>
      tpu.vector_store %arg9[%c0_13, %c0_14, %c0_15], %14 {strides = array<i32>} : memref<2x1x128xf32, #tpu.memory_space<vmem>>, vector<2x1x128xf32>,
    } else {
    }
    %c0 = arith.constant 0 : index
    %c0_1 = arith.constant 0 : index
    %c0_2 = arith.constant 0 : index
    %3 = vector.load %arg2[%c0, %c0_1, %c0_2] : memref<2x128x128xbf16, #tpu.memory_space<vmem>>, vector<2x128x128xbf16>
    %c0_3 = arith.constant 0 : index
    %c0_4 = arith.constant 0 : index
    %4 = vector.load %arg3[%c0_3, %c0_4] : memref<2x128xf32, #tpu.memory_space<vmem>>, vector<2x128xf32>
    %5 = arith.truncf %4 : vector<2x128xf32> to vector<2x128xbf16>
    %6 = vector.shape_cast %5 : vector<2x128xbf16> to vector<2x1x128xbf16>
    "tpu.trace_start"() <{level = 10 : i32, message = "bql,blh->bqh"}> : () -> ()
    %cst = arith.constant dense<0.000000e+00> : vector<2x1x128xf32>
    %7 = tpu.matmul %6, %3, %cst {dimension_numbers = #tpu.dot_dimension_numbers<[2], [1], [1], [2], [0, 0, 0, 1, 1, 2], [0], [0]>} : vector<2x1x128xbf16>, vector<2x128x128xbf16>, vector<2x1x128xf32> -> vector<2x1x128xf32>
    "tpu.trace_stop"() : () -> ()
    %c0_5 = arith.constant 0 : index
    %c0_6 = arith.constant 0 : index
    %c0_7 = arith.constant 0 : index
    %8 = vector.load %arg9[%c0_5, %c0_6, %c0_7] : memref<2x1x128xf32, #tpu.memory_space<vmem>>, vector<2x1x128xf32>
    %9 = arith.addf %8, %7 : vector<2x1x128xf32>
    %c0_8 = arith.constant 0 : index
    %c0_9 = arith.constant 0 : index
    %c0_10 = arith.constant 0 : index
    %10 = vector.load %arg9[%c0_8, %c0_9, %c0_10] : memref<2x1x128xf32, #tpu.memory_space<vmem>>, vector<2x1x128xf32>
    tpu.vector_store %arg9[%c0_8, %c0_9, %c0_10], %9 {strides = array<i32>} : memref<2x1x128xf32, #tpu.memory_space<vmem>>, vector<2x1x128xf32>,
    %c1_i32 = arith.constant 1 : i32
    %11 = arith.cmpi eq, %arg1, %c1_i32 : i32
    %12 = arith.extui %11 : i1 to i32
    %c0_i32_11 = arith.constant 0 : i32
    %13 = arith.cmpi ne, %12, %c0_i32_11 : i32
    scf.if %13 {
      %c0_12 = arith.constant 0 : index
      %c0_13 = arith.constant 0 : index
      %c0_14 = arith.constant 0 : index
      %14 = vector.load %arg9[%c0_12, %c0_13, %c0_14] : memref<2x1x128xf32, #tpu.memory_space<vmem>>, vector<2x1x128xf32>
      %15 = vector.shape_cast %14 : vector<2x1x128xf32> to vector<2x128xf32>
      %c0_15 = arith.constant 0 : index
      %c0_16 = arith.constant 0 : index
      %16 = vector.load %arg5[%c0_15, %c0_16] : memref<128x128xf32, #tpu.memory_space<vmem>>, vector<128x128xf32>
      %cst_17 = arith.constant dense<0.000000e+00> : vector<2x128xf32>
      %17 = tpu.matmul %15, %16, %cst_17 {dimension_numbers = #tpu.dot_dimension_numbers<[1], [0], [0], [1], [0, 0, 1, 1], [], []>} : vector<2x128xf32>, vector<128x128xf32>, vector<2x128xf32> -> vector<2x128xf32>
      %c0_18 = arith.constant 0 : index
      %c0_19 = arith.constant 0 : index
      %18 = vector.load %arg4[%c0_18, %c0_19] : memref<2x16xf32, #tpu.memory_space<vmem>>, vector<2x16xf32>
      %c0_20 = arith.constant 0 : index
      %c0_21 = arith.constant 0 : index
      %19 = vector.load %arg6[%c0_20, %c0_21] : memref<16x128xf32, #tpu.memory_space<vmem>>, vector<16x128xf32>
      %cst_22 = arith.constant dense<0.000000e+00> : vector<2x128xf32>
      %20 = tpu.matmul %18, %19, %cst_22 {dimension_numbers = #tpu.dot_dimension_numbers<[1], [0], [0], [1], [0, 0, 1, 1], [], []>} : vector<2x16xf32>, vector<16x128xf32>, vector<2x128xf32> -> vector<2x128xf32>
      %21 = arith.addf %17, %20 : vector<2x128xf32>
      %c0_23 = arith.constant 0 : index
      %c0_24 = arith.constant 0 : index
      %22 = vector.load %arg7[%c0_23, %c0_24] : memref<1x128xf32, #tpu.memory_space<vmem>>, vector<1x128xf32>
      %23 = vector.broadcast %22 : vector<1x128xf32> to vector<2x128xf32>
      %24 = arith.addf %21, %23 : vector<2x128xf32>
      %c0_25 = arith.constant 0 : index
      %c0_26 = arith.constant 0 : index
      %25 = vector.load %arg8[%c0_25, %c0_26] : memref<2x128xf32, #tpu.memory_space<vmem>>, vector<2x128xf32>
      tpu.vector_store %arg8[%c0_25, %c0_26], %24 {strides = array<i32>} : memref<2x128xf32, #tpu.memory_space<vmem>>, vector<2x128xf32>,
    } else {
    }
    return
  }
  func.func @transform_0(%arg0: i32, %arg1: i32) -> (i32, i32, i32) {
    %c0_i32 = arith.constant 0 : i32
    %c0_i32_0 = arith.constant 0 : i32
    return %arg0, %arg1, %c0_i32 : i32, i32, i32
  }
  func.func @transform_1(%arg0: i32, %arg1: i32) -> (i32, i32) {
    %c0_i32 = arith.constant 0 : i32
    return %arg0, %arg1 : i32, i32
  }
  func.func @transform_2(%arg0: i32, %arg1: i32) -> (i32, i32) {
    %c0_i32 = arith.constant 0 : i32
    %c0_i32_0 = arith.constant 0 : i32
    return %arg0, %c0_i32 : i32, i32
  }
  func.func @transform_3(%arg0: i32, %arg1: i32) -> (i32, i32) {
    %c0_i32 = arith.constant 0 : i32
    %c0_i32_0 = arith.constant 0 : i32
    %c0_i32_1 = arith.constant 0 : i32
    return %c0_i32, %c0_i32_0 : i32, i32
  }
  func.func @transform_4(%arg0: i32, %arg1: i32) -> (i32, i32) {
    %c0_i32 = arith.constant 0 : i32
    %c0_i32_0 = arith.constant 0 : i32
    %c0_i32_1 = arith.constant 0 : i32
    return %c0_i32, %c0_i32_0 : i32, i32
  }
  func.func @transform_5(%arg0: i32, %arg1: i32) -> (i32, i32) {
    %c0_i32 = arith.constant 0 : i32
    %c0_i32_0 = arith.constant 0 : i32
    %c0_i32_1 = arith.constant 0 : i32
    return %c0_i32, %c0_i32_0 : i32, i32
  }
  func.func @transform_6(%arg0: i32, %arg1: i32) -> (i32, i32) {
    %c0_i32 = arith.constant 0 : i32
    %c0_i32_0 = arith.constant 0 : i32
    return %arg0, %c0_i32 : i32, i32
  }
}

</mosaic_0001>

<llo_original>
// kernel: bert_emo_head.1
$region0: #{bert_emo_head.1}
  #allocation0 [shape = 'u32[]', space=smem, size = 0x4, offset = 0x4, fixed_abs, tag = 'smem constant byte address 0x4 - core index']
  #allocation1 [shape = 'u32[72,128]{1,0:T(1,128)}', space=vmem, size = 0x9000, scoped, tag = 'internal scratch']
  #allocation2 [shape = 'f32[2,1,128]{2,1,0:T(1,128)}', space=vmem, size = 0x400, scoped, tag = 'scratch operand']
  %s0 = inlined_call_operand.vmem [shape: bf16[2,256,128], index: 0, kind: input, shape index: {}]
  %s1 = inlined_call_operand.vmem [shape: f32[2,256], index: 1, kind: input, shape index: {}]
  %s2 = inlined_call_operand.vmem [shape: f32[2,16], index: 2, kind: input, shape index: {}]
  %s3 = inlined_call_operand.vmem [shape: f32[128,128], index: 3, kind: input, shape index: {}]
  %s4 = inlined_call_operand.vmem [shape: f32[16,128], index: 4, kind: input, shape index: {}]
  %s5 = inlined_call_operand.vmem [shape: f32[1,128], index: 5, kind: input, shape index: {}]
  %s6 = inlined_call_operand.hbm [shape: f32[2,128], index: 6, kind: output, shape index: {}]
  %s7 = sld [smem:[#allocation0]]
  $region106: #{bert_emo_head.1} parent=0
    _
  %s9 = ssub.s32 1, %s7
  %s10 = scalar_select 0, %s9, %s7
  $region1: #{bert_emo_head.1} parent=0
    #allocation3 [shape = 'u8[131072]{0}', space=vmem, size = 0x20000, scoped, tag = 'input window, operand 0']
    #allocation4 [shape = 'u8[1024]{0}', space=vmem, size = 0x400, scoped, tag = 'output window, operand 0, single buffered']
    #allocation5 [shape = 's32[2]{0}', space=sflag, size = 0x8, scoped, tag = 'scoped memory for bert_emo_head.1']
    %11 = vsyncpa [#allocation5], 0
    loop: start=0, step=1, limit=4
    $region2: #{bert_emo_head.1} parent=1 // loop_pre_header
      _
    $region3: #{bert_emo_head.1} parent=1 // loop_header
      %s13 = sphi 0, %s17
      %p14 = scmp.ge.s32.totalorder %s13, 4
      %s20 = sphi 0, %s32
      %s21 = sphi 0, %s28
      %s22 = sphi 0, %s20
      %s23 = sphi 0, %s21
      %s24 = sphi 0, %s22
      %s25 = sphi 0, %s23
      %s37 = sphi 0, %s39
      %s40 = sphi 0, %s37
      %s41 = sphi 0, %s40
      %s57 = sphi 0, %s41
      %s65 = sphi 0, %s67
      %s68 = sphi 0, %s65
      %s69 = sphi 0, %s68
      %s85 = sphi 0, %s69
      %s91 = sphi 0, %s93
      %s94 = sphi 0, %s91
      %s95 = sphi 0, %s94
      %s111 = sphi 0, %s95
      %s115 = sphi 0, %s115
      %s117 = sphi 0, %s115
      %s118 = sphi 0, %s117
      %s132 = sphi 0, %s118
      %s136 = sphi 0, %s136
      %s138 = sphi 0, %s136
      %s139 = sphi 0, %s138
      %s153 = sphi 0, %s139
      %s157 = sphi 0, %s157
      %s159 = sphi 0, %s157
      %s160 = sphi 0, %s159
      %s174 = sphi 0, %s160
      %s180 = sphi 0, %s182
      %s183 = sphi 0, %s180
      %s184 = sphi 0, %s183
      %s200 = sphi 0, %s184
    $region4: #{bert_emo_head.1} parent=1 // loop_header_branch
      %16 = sbr.rel (%p14) target = $region8
    $region5: #{bert_emo_head.1} parent=1 // loop_body
      %s18 = ssub.s32 %s13, 1
      %s19 = ssub.s32 %s13, 2
      %s26 = sadd.s32 1, %s21
      %p27 = scmp.ge.s32.totalorder %s26, 2
      %s28 = scalar_select %p27, 0, %s26
      %s29 = sadd.s32 1, %s20
      %s30 = scalar_select %p27, %s29, %s20
      %p31 = scmp.ge.s32.totalorder %s30, 1
      %s32 = scalar_select %p31, 0, %s30
      %s33 = ssub.s32 %s20, %s32
      %s34 = ssub.s32 %s21, %s28
      %s35 = sor.u32 %s33, %s34
      %p36 = scmp.eq.s32.totalorder %s35, 0
      %s38 = sadd.s32 %s37, 1
      %s39 = scalar_select %p36, %s37, %s38
      %p42 = pneg %p36
      %p43 = scmp.eq.s32.totalorder %s13, 1
      %p44 = por %p42, %p43
      %p45 = scmp.ne.s32.totalorder %s37, %s40
      %p46 = scmp.eq.s32.totalorder %s13, 0
      %p47 = por %p45, %p46
      %p48 = scmp.ne.s32.totalorder %s37, %s40
      %p49 = scmp.eq.s32.totalorder %s18, 1
      %p50 = por %p48, %p49
      %p51 = scmp.ne.s32.totalorder %s40, %s41
      %p52 = scmp.eq.s32.totalorder %s18, 0
      %p53 = por %p51, %p52
      %p54 = scmp.ne.s32.totalorder %s40, %s41
      %p55 = scmp.eq.s32.totalorder %s19, 1
      %p56 = por %p54, %p55
      %p58 = scmp.ne.s32.totalorder %s41, %s57
      %p59 = scmp.eq.s32.totalorder %s19, 0
      %p60 = por %p58, %p59
      %s61 = ssub.s32 %s20, %s32
      %s62 = ssub.s32 %s21, %s28
      %s63 = sor.u32 %s61, %s62
      %p64 = scmp.eq.s32.totalorder %s63, 0
      %s66 = sadd.s32 %s65, 1
      %s67 = scalar_select %p64, %s65, %s66
      %p70 = pneg %p64
      %p71 = scmp.eq.s32.totalorder %s13, 1
      %p72 = por %p70, %p71
      %p73 = scmp.ne.s32.totalorder %s65, %s68
      %p74 = scmp.eq.s32.totalorder %s13, 0
      %p75 = por %p73, %p74
      %p76 = scmp.ne.s32.totalorder %s65, %s68
      %p77 = scmp.eq.s32.totalorder %s18, 1
      %p78 = por %p76, %p77
      %p79 = scmp.ne.s32.totalorder %s68, %s69
      %p80 = scmp.eq.s32.totalorder %s18, 0
      %p81 = por %p79, %p80
      %p82 = scmp.ne.s32.totalorder %s68, %s69
      %p83 = scmp.eq.s32.totalorder %s19, 1
      %p84 = por %p82, %p83
      %p86 = scmp.ne.s32.totalorder %s69, %s85
      %p87 = scmp.eq.s32.totalorder %s19, 0
      %p88 = por %p86, %p87
      %s89 = ssub.s32 %s20, %s32
      %p90 = scmp.eq.s32.totalorder %s89, 0
      %s92 = sadd.s32 %s91, 1
      %s93 = scalar_select %p90, %s91, %s92
      %p96 = pneg %p90
      %p97 = scmp.eq.s32.totalorder %s13, 1
      %p98 = por %p96, %p97
      %p99 = scmp.ne.s32.totalorder %s91, %s94
      %p100 = scmp.eq.s32.totalorder %s13, 0
      %p101 = por %p99, %p100
      %p102 = scmp.ne.s32.totalorder %s91, %s94
      %p103 = scmp.eq.s32.totalorder %s18, 1
      %p104 = por %p102, %p103
      %p105 = scmp.ne.s32.totalorder %s94, %s95
      %p106 = scmp.eq.s32.totalorder %s18, 0
      %p107 = por %p105, %p106
      %p108 = scmp.ne.s32.totalorder %s94, %s95
      %p109 = scmp.eq.s32.totalorder %s19, 1
      %p110 = por %p108, %p109
      %p112 = scmp.ne.s32.totalorder %s95, %s111
      %p113 = scmp.eq.s32.totalorder %s19, 0
      %p114 = por %p112, %p113
      %s116 = sadd.s32 %s115, 1
      %p119 = scmp.eq.s32.totalorder %s13, 1
      %p120 = scmp.ne.s32.totalorder %s115, %s117
      %p121 = scmp.eq.s32.totalorder %s13, 0
      %p122 = por %p120, %p121
      %p123 = scmp.ne.s32.totalorder %s115, %s117
      %p124 = scmp.eq.s32.totalorder %s18, 1
      %p125 = por %p123, %p124
      %p126 = scmp.ne.s32.totalorder %s117, %s118
      %p127 = scmp.eq.s32.totalorder %s18, 0
      %p128 = por %p126, %p127
      %p129 = scmp.ne.s32.totalorder %s117, %s118
      %p130 = scmp.eq.s32.totalorder %s19, 1
      %p131 = por %p129, %p130
      %p133 = scmp.ne.s32.totalorder %s118, %s132
      %p134 = scmp.eq.s32.totalorder %s19, 0
      %p135 = por %p133, %p134
      %s137 = sadd.s32 %s136, 1
      %p140 = scmp.eq.s32.totalorder %s13, 1
      %p141 = scmp.ne.s32.totalorder %s136, %s138
      %p142 = scmp.eq.s32.totalorder %s13, 0
      %p143 = por %p141, %p142
      %p144 = scmp.ne.s32.totalorder %s136, %s138
      %p145 = scmp.eq.s32.totalorder %s18, 1
      %p146 = por %p144, %p145
      %p147 = scmp.ne.s32.totalorder %s138, %s139
      %p148 = scmp.eq.s32.totalorder %s18, 0
      %p149 = por %p147, %p148
      %p150 = scmp.ne.s32.totalorder %s138, %s139
      %p151 = scmp.eq.s32.totalorder %s19, 1
      %p152 = por %p150, %p151
      %p154 = scmp.ne.s32.totalorder %s139, %s153
      %p155 = scmp.eq.s32.totalorder %s19, 0
      %p156 = por %p154, %p155
      %s158 = sadd.s32 %s157, 1
      %p161 = scmp.eq.s32.totalorder %s13, 1
      %p162 = scmp.ne.s32.totalorder %s157, %s159
      %p163 = scmp.eq.s32.totalorder %s13, 0
      %p164 = por %p162, %p163
      %p165 = scmp.ne.s32.totalorder %s157, %s159
      %p166 = scmp.eq.s32.totalorder %s18, 1
      %p167 = por %p165, %p166
      %p168 = scmp.ne.s32.totalorder %s159, %s160
      %p169 = scmp.eq.s32.totalorder %s18, 0
      %p170 = por %p168, %p169
      %p171 = scmp.ne.s32.totalorder %s159, %s160
      %p172 = scmp.eq.s32.totalorder %s19, 1
      %p173 = por %p171, %p172
      %p175 = scmp.ne.s32.totalorder %s160, %s174
      %p176 = scmp.eq.s32.totalorder %s19, 0
      %p177 = por %p175, %p176
      %s178 = ssub.s32 %s20, %s32
      %p179 = scmp.eq.s32.totalorder %s178, 0
      %s181 = sadd.s32 %s180, 1
      %s182 = scalar_select %p179, %s180, %s181
      %p185 = pneg %p179
      %p186 = scmp.eq.s32.totalorder %s13, 1
      %p187 = por %p185, %p186
      %p188 = scmp.ne.s32.totalorder %s180, %s183
      %p189 = scmp.eq.s32.totalorder %s13, 0
      %p190 = por %p188, %p189
      %p191 = scmp.ne.s32.totalorder %s180, %s183
      %p192 = scmp.eq.s32.totalorder %s18, 1
      %p193 = por %p191, %p192
      %p194 = scmp.ne.s32.totalorder %s183, %s184
      %p195 = scmp.eq.s32.totalorder %s18, 0
      %p196 = por %p194, %p195
      %p197 = scmp.ne.s32.totalorder %s183, %s184
      %p198 = scmp.eq.s32.totalorder %s19, 1
      %p199 = por %p197, %p198
      %p201 = scmp.ne.s32.totalorder %s184, %s200
      %p202 = scmp.eq.s32.totalorder %s19, 0
      %p203 = por %p201, %p202
      %p204 = scmp.le.s32.totalorder 1, %s13
      %p205 = scmp.lt.s32.totalorder %s13, 3
      %p206 = pnand %p204, %p205
      %p207 = pneg %p206
      // Predicated region
      $region9: #{bert_emo_head.1} parent=5 // pred_check
        _
      $region10: #{bert_emo_head.1} parent=5 // pred_check_branch
        %209 = sbr.rel (%p206) target = $region12
      $region11: #{bert_emo_head.1} parent=5 // pred_region
        %s210 = ssub.s32 %s13, 1
        // Predicated region
        $region13: #{bert_emo_head.1} parent=11 // pred_check
          %p211 = pneg %p107
        $region14: #{bert_emo_head.1} parent=11 // pred_check_branch
          %213 = sbr.rel (%p211) target = $region16
        $region15: #{bert_emo_head.1} parent=11 // pred_region
          %p214 = scmp.lt.s32.totalorder %s22, 0
          %s215 = scalar_select %p214, %s22, 0
          %s216 = smul.addr %s215, 2
          %s217 = scalar_lea.vmem %s2, %s216
        $region16: #{bert_emo_head.1} parent=11 // pred_fallthru
          _
        // Predicated region
        $region17: #{bert_emo_head.1} parent=11 // pred_check
          %p218 = pneg %p128
        $region18: #{bert_emo_head.1} parent=11 // pred_check_branch
          %220 = sbr.rel (%p218) target = $region20
        $region19: #{bert_emo_head.1} parent=11 // pred_region
          _
        $region20: #{bert_emo_head.1} parent=11 // pred_fallthru
          _
        // Predicated region
        $region21: #{bert_emo_head.1} parent=11 // pred_check
          %p221 = pneg %p149
        $region22: #{bert_emo_head.1} parent=11 // pred_check_branch
          %223 = sbr.rel (%p221) target = $region24
        $region23: #{bert_emo_head.1} parent=11 // pred_region
          _
        $region24: #{bert_emo_head.1} parent=11 // pred_fallthru
          _
        // Predicated region
        $region25: #{bert_emo_head.1} parent=11 // pred_check
          %p224 = pneg %p170
        $region26: #{bert_emo_head.1} parent=11 // pred_check_branch
          %226 = sbr.rel (%p224) target = $region28
        $region27: #{bert_emo_head.1} parent=11 // pred_region
          _
        $region28: #{bert_emo_head.1} parent=11 // pred_fallthru
          _
      $region12: #{bert_emo_head.1} parent=5 // pred_fallthru
        _
      %p227 = scmp.lt.s32.totalorder %s13, 2
      // Predicated region
      $region29: #{bert_emo_head.1} parent=5 // pred_check
        %p228 = pneg %p227
      $region30: #{bert_emo_head.1} parent=5 // pred_check_branch
        %230 = sbr.rel (%p228) target = $region32
      $region31: #{bert_emo_head.1} parent=5 // pred_region
        // Predicated region
        $region33: #{bert_emo_head.1} parent=31 // pred_check
          %p231 = pneg %p47
        $region34: #{bert_emo_head.1} parent=31 // pred_check_branch
          %233 = sbr.rel (%p231) target = $region36
        $region35: #{bert_emo_head.1} parent=31 // pred_region
          %s234 = sand.u32 %s37, 1
          %s235 = sand.u32 %s37, 1
          %s236 = smul.addr %s235, 128
          %s237 = scalar_lea.vmem [#allocation3], %s236
          %s238 = smul.u32 2, %s20
          %s239 = smul.u32 16, %s21
          %s240 = smul.addr %s238, 32
          %s241 = sadd.s32 %s239, %s240
          %s242 = smul.addr %s241, 4
          %s243 = scalar_lea.vmem %s0, %s242
          // Predicated region
          $region37: #{bert_emo_head.1} parent=35 // pred_check
            _
          $region38: #{bert_emo_head.1} parent=35 // pred_check_branch
            %245 = sbr.rel (0) target = $region40
          $region39: #{bert_emo_head.1} parent=35 // pred_region
            // Predicated region
            $region41: #{bert_emo_head.1} parent=39 // pred_check
              _
            $region42: #{bert_emo_head.1} parent=39 // pred_check_branch
              %247 = sbr.rel target = $region44
            $region43: #{bert_emo_head.1} parent=39 // pred_region
              // Predicated region
              $region56: #{bert_emo_head.1} parent=43 // pred_check
                _
              $region57: #{bert_emo_head.1} parent=43 // pred_check_branch
                %325 = sbr.rel (0) target = $region59
              $region58: #{bert_emo_head.1} parent=43 // pred_region
                loop: start=0, step=1, limit=1
                $region60: #{bert_emo_head.1} parent=58 // loop_pre_header
                  _
                $region61: #{bert_emo_head.1} parent=58 // loop_header
                  %s327 = sphi 0, %s331
                  %p328 = scmp.ge.s32.totalorder %s327, 1
                  %s332 = sphi %s243, %s243
                  %s333 = sphi %s237, %s237
                $region62: #{bert_emo_head.1} parent=58 // loop_header_branch
                  %330 = sbr.rel (%p328) target = $region66
                $region63: #{bert_emo_head.1} parent=58 // loop_body
                  _
                $region64: #{bert_emo_head.1} parent=58 // loop_footer
                  %s331 = sadd.s32 1, %s327
                $region65: #{bert_emo_head.1} parent=58 // loop_footer_branch
                  %326 = sbr.rel target = $region61
                $region66: #{bert_emo_head.1} parent=58 // loop_exit
                  _
                %s335 = ssub.s32 16, 1
                loop: start=0, step=1, limit=1
                $region67: #{bert_emo_head.1} parent=58 // loop_pre_header
                  _
                $region68: #{bert_emo_head.1} parent=58 // loop_header
                  %s337 = sphi 0, %s341
                  %p338 = scmp.ge.s32.totalorder %s337, 1
                  %s342 = sphi %s243, %s243
                  %s343 = sphi %s237, %s237
                $region69: #{bert_emo_head.1} parent=58 // loop_header_branch
                  %340 = sbr.rel (%p338) target = $region73
                $region70: #{bert_emo_head.1} parent=58 // loop_body
                  %v344 = vld [vmem:[%s342] sm:%s335]
                  %345 = vst [vmem:[%s343] sm:%s335] %v344
                  %v346 = vld [vmem:[%s342 + $0x4] sm:%s335]
                  %347 = vst [vmem:[%s343 + $0x4] sm:%s335] %v346
                  %v348 = vld [vmem:[%s342 + $0x8] sm:%s335]
                  %349 = vst [vmem:[%s343 + $0x8] sm:%s335] %v348
                  %v350 = vld [vmem:[%s342 + $0xc] sm:%s335]
                  %351 = vst [vmem:[%s343 + $0xc] sm:%s335] %v350
                  %v352 = vld [vmem:[%s342 + $0x10] sm:%s335]
                  %353 = vst [vmem:[%s343 + $0x10] sm:%s335] %v352
                  %v354 = vld [vmem:[%s342 + $0x14] sm:%s335]
                  %355 = vst [vmem:[%s343 + $0x14] sm:%s335] %v354
                  %v356 = vld [vmem:[%s342 + $0x18] sm:%s335]
                  %357 = vst [vmem:[%s343 + $0x18] sm:%s335] %v356
                  %v358 = vld [vmem:[%s342 + $0x1c] sm:%s335]
                  %359 = vst [vmem:[%s343 + $0x1c] sm:%s335] %v358
                  %v360 = vld [vmem:[%s342 + $0x20] sm:%s335]
                  %361 = vst [vmem:[%s343 + $0x20] sm:%s335] %v360
                  %v362 = vld [vmem:[%s342 + $0x24] sm:%s335]
                  %363 = vst [vmem:[%s343 + $0x24] sm:%s335] %v362
                  %v364 = vld [vmem:[%s342 + $0x28] sm:%s335]
                  %365 = vst [vmem:[%s343 + $0x28] sm:%s335] %v364
                  %v366 = vld [vmem:[%s342 + $0x2c] sm:%s335]
                  %367 = vst [vmem:[%s343 + $0x2c] sm:%s335] %v366
                  %v368 = vld [vmem:[%s342 + $0x30] sm:%s335]
                  %369 = vst [vmem:[%s343 + $0x30] sm:%s335] %v368
                  %v370 = vld [vmem:[%s342 + $0x34] sm:%s335]
                  %371 = vst [vmem:[%s343 + $0x34] sm:%s335] %v370
                  %v372 = vld [vmem:[%s342 + $0x38] sm:%s335]
                  %373 = vst [vmem:[%s343 + $0x38] sm:%s335] %v372
                  %v374 = vld [vmem:[%s342 + $0x3c] sm:%s335]
                  %375 = vst [vmem:[%s343 + $0x3c] sm:%s335] %v374
                  %v376 = vld [vmem:[%s342 + $0x80] sm:%s335]
                  %377 = vst [vmem:[%s343 + $0x40] sm:%s335] %v376
                  %v378 = vld [vmem:[%s342 + $0x84] sm:%s335]
                  %379 = vst [vmem:[%s343 + $0x44] sm:%s335] %v378
                  %v380 = vld [vmem:[%s342 + $0x88] sm:%s335]
                  %381 = vst [vmem:[%s343 + $0x48] sm:%s335] %v380
                  %v382 = vld [vmem:[%s342 + $0x8c] sm:%s335]
                  %383 = vst [vmem:[%s343 + $0x4c] sm:%s335] %v382
                  %v384 = vld [vmem:[%s342 + $0x90] sm:%s335]
                  %385 = vst [vmem:[%s343 + $0x50] sm:%s335] %v384
                  %v386 = vld [vmem:[%s342 + $0x94] sm:%s335]
                  %387 = vst [vmem:[%s343 + $0x54] sm:%s335] %v386
                  %v388 = vld [vmem:[%s342 + $0x98] sm:%s335]
                  %389 = vst [vmem:[%s343 + $0x58] sm:%s335] %v388
                  %v390 = vld [vmem:[%s342 + $0x9c] sm:%s335]
                  %391 = vst [vmem:[%s343 + $0x5c] sm:%s335] %v390
                  %v392 = vld [vmem:[%s342 + $0xa0] sm:%s335]
                  %393 = vst [vmem:[%s343 + $0x60] sm:%s335] %v392
                  %v394 = vld [vmem:[%s342 + $0xa4] sm:%s335]
                  %395 = vst [vmem:[%s343 + $0x64] sm:%s335] %v394
                  %v396 = vld [vmem:[%s342 + $0xa8] sm:%s335]
                  %397 = vst [vmem:[%s343 + $0x68] sm:%s335] %v396
                  %v398 = vld [vmem:[%s342 + $0xac] sm:%s335]
                  %399 = vst [vmem:[%s343 + $0x6c] sm:%s335] %v398
                  %v400 = vld [vmem:[%s342 + $0xb0] sm:%s335]
                  %401 = vst [vmem:[%s343 + $0x70] sm:%s335] %v400
                  %v402 = vld [vmem:[%s342 + $0xb4] sm:%s335]
                  %403 = vst [vmem:[%s343 + $0x74] sm:%s335] %v402
                  %v404 = vld [vmem:[%s342 + $0xb8] sm:%s335]
                  %405 = vst [vmem:[%s343 + $0x78] sm:%s335] %v404
                  %v406 = vld [vmem:[%s342 + $0xbc] sm:%s335]
                  %407 = vst [vmem:[%s343 + $0x7c] sm:%s335] %v406
                $region71: #{bert_emo_head.1} parent=58 // loop_footer
                  %s341 = sadd.s32 1, %s337
                $region72: #{bert_emo_head.1} parent=58 // loop_footer_branch
                  %336 = sbr.rel target = $region68
                $region73: #{bert_emo_head.1} parent=58 // loop_exit
                  _
              $region59: #{bert_emo_head.1} parent=43 // pred_fallthru
                _
            $region44: #{bert_emo_head.1} parent=39 // pred_fallthru
              _
            // Predicated region
            $region45: #{bert_emo_head.1} parent=39 // pred_check
              _
            $region46: #{bert_emo_head.1} parent=39 // pred_check_branch
              %249 = sbr.rel (0) target = $region48
            $region47: #{bert_emo_head.1} parent=39 // pred_region
              %s251 = ssub.s32 16, 1
              loop: start=0, step=1, limit=1
              $region49: #{bert_emo_head.1} parent=47 // loop_pre_header
                _
              $region50: #{bert_emo_head.1} parent=47 // loop_header
                %s253 = sphi 0, %s257
                %p254 = scmp.ge.s32.totalorder %s253, 1
                %s258 = sphi %s243, %s243
                %s259 = sphi %s237, %s237
              $region51: #{bert_emo_head.1} parent=47 // loop_header_branch
                %256 = sbr.rel (%p254) target = $region55
              $region52: #{bert_emo_head.1} parent=47 // loop_body
                %v260 = vld [vmem:[%s258] sm:%s251]
                %261 = vst [vmem:[%s259] sm:%s251] %v260
                %v262 = vld [vmem:[%s258 + $0x4] sm:%s251]
                %263 = vst [vmem:[%s259 + $0x4] sm:%s251] %v262
                %v264 = vld [vmem:[%s258 + $0x8] sm:%s251]
                %265 = vst [vmem:[%s259 + $0x8] sm:%s251] %v264
                %v266 = vld [vmem:[%s258 + $0xc] sm:%s251]
                %267 = vst [vmem:[%s259 + $0xc] sm:%s251] %v266
                %v268 = vld [vmem:[%s258 + $0x10] sm:%s251]
                %269 = vst [vmem:[%s259 + $0x10] sm:%s251] %v268
                %v270 = vld [vmem:[%s258 + $0x14] sm:%s251]
                %271 = vst [vmem:[%s259 + $0x14] sm:%s251] %v270
                %v272 = vld [vmem:[%s258 + $0x18] sm:%s251]
                %273 = vst [vmem:[%s259 + $0x18] sm:%s251] %v272
                %v274 = vld [vmem:[%s258 + $0x1c] sm:%s251]
                %275 = vst [vmem:[%s259 + $0x1c] sm:%s251] %v274
                %v276 = vld [vmem:[%s258 + $0x20] sm:%s251]
                %277 = vst [vmem:[%s259 + $0x20] sm:%s251] %v276
                %v278 = vld [vmem:[%s258 + $0x24] sm:%s251]
                %279 = vst [vmem:[%s259 + $0x24] sm:%s251] %v278
                %v280 = vld [vmem:[%s258 + $0x28] sm:%s251]
                %281 = vst [vmem:[%s259 + $0x28] sm:%s251] %v280
                %v282 = vld [vmem:[%s258 + $0x2c] sm:%s251]
                %283 = vst [vmem:[%s259 + $0x2c] sm:%s251] %v282
                %v284 = vld [vmem:[%s258 + $0x30] sm:%s251]
                %285 = vst [vmem:[%s259 + $0x30] sm:%s251] %v284
                %v286 = vld [vmem:[%s258 + $0x34] sm:%s251]
                %287 = vst [vmem:[%s259 + $0x34] sm:%s251] %v286
                %v288 = vld [vmem:[%s258 + $0x38] sm:%s251]
                %289 = vst [vmem:[%s259 + $0x38] sm:%s251] %v288
                %v290 = vld [vmem:[%s258 + $0x3c] sm:%s251]
                %291 = vst [vmem:[%s259 + $0x3c] sm:%s251] %v290
                %v292 = vld [vmem:[%s258 + $0x80] sm:%s251]
                %293 = vst [vmem:[%s259 + $0x40] sm:%s251] %v292
                %v294 = vld [vmem:[%s258 + $0x84] sm:%s251]
                %295 = vst [vmem:[%s259 + $0x44] sm:%s251] %v294
                %v296 = vld [vmem:[%s258 + $0x88] sm:%s251]
                %297 = vst [vmem:[%s259 + $0x48] sm:%s251] %v296
                %v298 = vld [vmem:[%s258 + $0x8c] sm:%s251]
                %299 = vst [vmem:[%s259 + $0x4c] sm:%s251] %v298
                %v300 = vld [vmem:[%s258 + $0x90] sm:%s251]
                %301 = vst [vmem:[%s259 + $0x50] sm:%s251] %v300
                %v302 = vld [vmem:[%s258 + $0x94] sm:%s251]
                %303 = vst [vmem:[%s259 + $0x54] sm:%s251] %v302
                %v304 = vld [vmem:[%s258 + $0x98] sm:%s251]
                %305 = vst [vmem:[%s259 + $0x58] sm:%s251] %v304
                %v306 = vld [vmem:[%s258 + $0x9c] sm:%s251]
                %307 = vst [vmem:[%s259 + $0x5c] sm:%s251] %v306
                %v308 = vld [vmem:[%s258 + $0xa0] sm:%s251]
                %309 = vst [vmem:[%s259 + $0x60] sm:%s251] %v308
                %v310 = vld [vmem:[%s258 + $0xa4] sm:%s251]
                %311 = vst [vmem:[%s259 + $0x64] sm:%s251] %v310
                %v312 = vld [vmem:[%s258 + $0xa8] sm:%s251]
                %313 = vst [vmem:[%s259 + $0x68] sm:%s251] %v312
                %v314 = vld [vmem:[%s258 + $0xac] sm:%s251]
                %315 = vst [vmem:[%s259 + $0x6c] sm:%s251] %v314
                %v316 = vld [vmem:[%s258 + $0xb0] sm:%s251]
                %317 = vst [vmem:[%s259 + $0x70] sm:%s251] %v316
                %v318 = vld [vmem:[%s258 + $0xb4] sm:%s251]
                %319 = vst [vmem:[%s259 + $0x74] sm:%s251] %v318
                %v320 = vld [vmem:[%s258 + $0xb8] sm:%s251]
                %321 = vst [vmem:[%s259 + $0x78] sm:%s251] %v320
                %v322 = vld [vmem:[%s258 + $0xbc] sm:%s251]
                %323 = vst [vmem:[%s259 + $0x7c] sm:%s251] %v322
              $region53: #{bert_emo_head.1} parent=47 // loop_footer
                %s257 = sadd.s32 1, %s253
              $region54: #{bert_emo_head.1} parent=47 // loop_footer_branch
                %252 = sbr.rel target = $region50
              $region55: #{bert_emo_head.1} parent=47 // loop_exit
                _
            $region48: #{bert_emo_head.1} parent=39 // pred_fallthru
              _
          $region40: #{bert_emo_head.1} parent=35 // pred_fallthru
            _
          %408 = vnop
        $region36: #{bert_emo_head.1} parent=31 // pred_fallthru
          _
        // Predicated region
        $region74: #{bert_emo_head.1} parent=31 // pred_check
          %p409 = pneg %p75
        $region75: #{bert_emo_head.1} parent=31 // pred_check_branch
          %411 = sbr.rel (%p409) target = $region77
        $region76: #{bert_emo_head.1} parent=31 // pred_region
          %p412 = scmp.lt.s32.totalorder %s20, 0
          %s413 = scalar_select %p412, %s20, 0
          %p414 = scmp.lt.s32.totalorder %s21, 1
          %s415 = scalar_select %p414, %s21, 1
          %s416 = smul.addr %s413, 2
          %s417 = sadd.s32 %s415, %s416
          %s418 = smul.addr %s417, 2
          %s419 = scalar_lea.vmem %s1, %s418
        $region77: #{bert_emo_head.1} parent=31 // pred_fallthru
          _
      $region32: #{bert_emo_head.1} parent=5 // pred_fallthru
        _
      %p420 = scmp.le.s32.totalorder 1, %s13
      %p421 = scmp.lt.s32.totalorder %s13, 3
      %p422 = pnand %p420, %p421
      %p423 = pneg %p422
      // Predicated region
      $region78: #{bert_emo_head.1} parent=5 // pred_check
        _
      $region79: #{bert_emo_head.1} parent=5 // pred_check_branch
        %425 = sbr.rel (%p422) target = $region81
      $region80: #{bert_emo_head.1} parent=5 // pred_region
        %s426 = ssub.s32 %s13, 1
        %s427 = sand.u32 %s40, 1
        %s428 = sand.u32 %s40, 1
        %s429 = smul.addr %s428, 128
        %s430 = scalar_lea.vmem [#allocation3], %s429
        // Predicated region
        $region82: #{bert_emo_head.1} parent=80 // pred_check
          %p431 = pneg %p53
        $region83: #{bert_emo_head.1} parent=80 // pred_check_branch
          %433 = sbr.rel (%p431) target = $region85
        $region84: #{bert_emo_head.1} parent=80 // pred_region
          _
        $region85: #{bert_emo_head.1} parent=80 // pred_fallthru
          _
        %s434 = sand.u32 %s40, 1
        %s435 = sand.u32 %s40, 1
        %s436 = smul.addr %s435, 128
        %s437 = scalar_lea.vmem [#allocation3], %s436
        %p438 = pneg %p53
        %p439 = pneg %p50
        %p440 = scmp.lt.s32.totalorder %s22, 0
        %s441 = scalar_select %p440, %s22, 0
        %p442 = scmp.lt.s32.totalorder %s23, 1
        %s443 = scalar_select %p442, %s23, 1
        %s444 = smul.addr %s441, 2
        %s445 = sadd.s32 %s443, %s444
        %s446 = smul.addr %s445, 2
        %s447 = scalar_lea.vmem %s1, %s446
        %p448 = pneg %p81
        %p449 = pneg %p78
        %p450 = scmp.lt.s32.totalorder %s22, 0
        %s451 = scalar_select %p450, %s22, 0
        %s452 = smul.addr %s451, 2
        %s453 = scalar_lea.vmem %s2, %s452
        %p454 = pneg %p107
        %p455 = pneg %p104
        %p456 = pneg %p128
        %p457 = pneg %p125
        %p458 = pneg %p149
        %p459 = pneg %p146
        %p460 = pneg %p170
        %p461 = pneg %p167
        %p462 = pneg %p196
        %p463 = pneg %p193
        %s464 = smul.u32 2, %s22
        %s465 = smul.u32 16, %s23
        %p466 = scmp.lt.s32.totalorder %s22, 0
        %s467 = scalar_select %p466, %s22, 0
        %p468 = scmp.lt.s32.totalorder %s23, 1
        %s469 = scalar_select %p468, %s23, 1
        %s470 = smul.addr %s467, 2
        %s471 = sadd.s32 %s469, %s470
        %s472 = smul.addr %s471, 2
        %s473 = scalar_lea.vmem %s1, %s472
        %p474 = scmp.lt.s32.totalorder %s22, 0
        %s475 = scalar_select %p474, %s22, 0
        %s476 = smul.addr %s475, 2
        %s477 = scalar_lea.vmem %s2, %s476
        %p478 = scmp.eq.s32.totalorder %s23, 0
        // Predicated region
        $region86: #{bert_emo_head.1} parent=80 // pred_check
          %p479 = pneg %p478
        $region87: #{bert_emo_head.1} parent=80 // pred_check_branch
          %481 = sbr.rel (%p479) target = $region89
        $region88: #{bert_emo_head.1} parent=80 // pred_region
          %482 = vst [vmem:[#allocation2] sm:$0x1] 0.0
          %483 = vst [vmem:[#allocation2 + $0x1] sm:$0x1] 0.0
        $region89: #{bert_emo_head.1} parent=80 // pred_fallthru
          _
        %v484 = vld [vmem:[%s430] sm:$0xf]
        %v485 = vld [vmem:[%s430 + $0x4] sm:$0xf]
        %v486 = vld [vmem:[%s430 + $0x8] sm:$0xf]
        %v487 = vld [vmem:[%s430 + $0xc] sm:$0xf]
        %v488 = vld [vmem:[%s430 + $0x10] sm:$0xf]
        %v489 = vld [vmem:[%s430 + $0x14] sm:$0xf]
        %v490 = vld [vmem:[%s430 + $0x18] sm:$0xf]
        %v491 = vld [vmem:[%s430 + $0x1c] sm:$0xf]
        %v492 = vld [vmem:[%s430 + $0x20] sm:$0xf]
        %v493 = vld [vmem:[%s430 + $0x24] sm:$0xf]
        %v494 = vld [vmem:[%s430 + $0x28] sm:$0xf]
        %v495 = vld [vmem:[%s430 + $0x2c] sm:$0xf]
        %v496 = vld [vmem:[%s430 + $0x30] sm:$0xf]
        %v497 = vld [vmem:[%s430 + $0x34] sm:$0xf]
        %v498 = vld [vmem:[%s430 + $0x38] sm:$0xf]
        %v499 = vld [vmem:[%s430 + $0x3c] sm:$0xf]
        %v500 = vld [vmem:[%s430 + $0x40] sm:$0xf]
        %v501 = vld [vmem:[%s430 + $0x44] sm:$0xf]
        %v502 = vld [vmem:[%s430 + $0x48] sm:$0xf]
        %v503 = vld [vmem:[%s430 + $0x4c] sm:$0xf]
        %v504 = vld [vmem:[%s430 + $0x50] sm:$0xf]
        %v505 = vld [vmem:[%s430 + $0x54] sm:$0xf]
        %v506 = vld [vmem:[%s430 + $0x58] sm:$0xf]
        %v507 = vld [vmem:[%s430 + $0x5c] sm:$0xf]
        %v508 = vld [vmem:[%s430 + $0x60] sm:$0xf]
        %v509 = vld [vmem:[%s430 + $0x64] sm:$0xf]
        %v510 = vld [vmem:[%s430 + $0x68] sm:$0xf]
        %v511 = vld [vmem:[%s430 + $0x6c] sm:$0xf]
        %v512 = vld [vmem:[%s430 + $0x70] sm:$0xf]
        %v513 = vld [vmem:[%s430 + $0x74] sm:$0xf]
        %v514 = vld [vmem:[%s430 + $0x78] sm:$0xf]
        %v515 = vld [vmem:[%s430 + $0x7c] sm:$0xf]
        %v516 = vld [vmem:[%s473] sm:$0x3]
        %v517 = vpack.c.bf16 %v516, %v516
        %v519 = vrot.slane %v517, 3
        %vm520 = vcmask 1040384
        %v523 = vsel %vm520, %v517, %v519
        %v525 = vunpack.i.l.s16 %v523
        %v526 = vunpack.i.h.s16 %v523
        %v527 = vpack.i.b16 %v525, %v525
        %v528 = vperm.slane %v527, 0
        %v546 = vunpack.c.l.b16 %v484
        %v547 = vunpack.c.l.b16 %v485
        %v548 = vunpack.c.l.b16 %v486
        %v549 = vunpack.c.l.b16 %v487
        %v550 = vunpack.c.l.b16 %v488
        %v551 = vunpack.c.l.b16 %v489
        %v552 = vunpack.c.l.b16 %v490
        %v553 = vunpack.c.l.b16 %v491
        %v554 = vunpack.c.l.b16 %v492
        %v555 = vunpack.c.l.b16 %v493
        %v556 = vunpack.c.l.b16 %v494
        %v557 = vunpack.c.l.b16 %v495
        %v558 = vunpack.c.l.b16 %v496
        %v559 = vunpack.c.l.b16 %v497
        %v560 = vunpack.c.l.b16 %v498
        %v561 = vunpack.c.l.b16 %v499
        %v562 = vpack.c.b16 %v547, %v546
        %v563 = vpack.c.b16 %v549, %v548
        %v564 = vpack.c.b16 %v551, %v550
        %v565 = vpack.c.b16 %v553, %v552
        %v566 = vpack.c.b16 %v555, %v554
        %v567 = vpack.c.b16 %v557, %v556
        %v568 = vpack.c.b16 %v559, %v558
        %v569 = vpack.c.b16 %v561, %v560
        %578 = vmatpush.bf16.msra.mxu0 %v569
        %579 = vmatpush.bf16.msra.mxu0 %v568
        %580 = vmatpush.bf16.msra.mxu0 %v567
        %581 = vmatpush.bf16.msra.mxu0 %v566
        %582 = vmatpush.bf16.msra.mxu0 %v565
        %583 = vmatpush.bf16.msra.mxu0 %v564
        %584 = vmatpush.bf16.msra.mxu0 %v563
        %585 = vmatpush.bf16.msra.mxu0 %v562
        %586 = vmatmul.bf16.gmra.mxu0 %v528
        %v587 = vpop.f32.mrf.mxu0
        %v588 = vadd.f32 0.0, %v587
        %v589 = vpop.f32.mrf.mxu0
        %590 = vdwg.mxu0
        %v591 = vpack.i.b16 %v526, %v526
        %v592 = vperm.slane %v591, 0
        %v610 = vunpack.c.l.b16 %v500
        %v611 = vunpack.c.l.b16 %v501
        %v612 = vunpack.c.l.b16 %v502
        %v613 = vunpack.c.l.b16 %v503
        %v614 = vunpack.c.l.b16 %v504
        %v615 = vunpack.c.l.b16 %v505
        %v616 = vunpack.c.l.b16 %v506
        %v617 = vunpack.c.l.b16 %v507
        %v618 = vunpack.c.l.b16 %v508
        %v619 = vunpack.c.l.b16 %v509
        %v620 = vunpack.c.l.b16 %v510
        %v621 = vunpack.c.l.b16 %v511
        %v622 = vunpack.c.l.b16 %v512
        %v623 = vunpack.c.l.b16 %v513
        %v624 = vunpack.c.l.b16 %v514
        %v625 = vunpack.c.l.b16 %v515
        %v626 = vpack.c.b16 %v611, %v610
        %v627 = vpack.c.b16 %v613, %v612
        %v628 = vpack.c.b16 %v615, %v614
        %v629 = vpack.c.b16 %v617, %v616
        %v630 = vpack.c.b16 %v619, %v618
        %v631 = vpack.c.b16 %v621, %v620
        %v632 = vpack.c.b16 %v623, %v622
        %v633 = vpack.c.b16 %v625, %v624
        %642 = vmatpush.bf16.msra.mxu0 %v633
        %643 = vmatpush.bf16.msra.mxu0 %v632
        %644 = vmatpush.bf16.msra.mxu0 %v631
        %645 = vmatpush.bf16.msra.mxu0 %v630
        %646 = vmatpush.bf16.msra.mxu0 %v629
        %647 = vmatpush.bf16.msra.mxu0 %v628
        %648 = vmatpush.bf16.msra.mxu0 %v627
        %649 = vmatpush.bf16.msra.mxu0 %v626
        %650 = vmatmul.bf16.gmra.mxu0 %v592
        %v651 = vpop.f32.mrf.mxu0
        %v652 = vadd.f32 0.0, %v651
        %v653 = vpop.f32.mrf.mxu0
        %654 = vdwg.mxu0
        %v655 = vld [vmem:[#allocation2] sm:$0x1]
        %v656 = vld [vmem:[#allocation2 + $0x1] sm:$0x1]
        %v657 = vadd.f32 %v655, %v588
        %v658 = vadd.f32 %v656, %v652
        %659 = vst [vmem:[#allocation2] sm:$0x1] %v657
        %660 = vst [vmem:[#allocation2 + $0x1] sm:$0x1] %v658
        %p661 = scmp.eq.s32.totalorder %s23, 1
        // Predicated region
        $region90: #{bert_emo_head.1} parent=80 // pred_check
          %p662 = pneg %p661
        $region91: #{bert_emo_head.1} parent=80 // pred_check_branch
          %664 = sbr.rel (%p662) target = $region93
        $region92: #{bert_emo_head.1} parent=80 // pred_region
          %v665 = vld [vmem:[#allocation2] sm:$0x1]
          %v666 = vld [vmem:[#allocation2 + $0x1] sm:$0x1]
          %v667 = vld [vmem:[%s3] sm:$0xff]
          %v668 = vld [vmem:[%s3 + $0x8] sm:$0xff]
          %v669 = vld [vmem:[%s3 + $0x10] sm:$0xff]
          %v670 = vld [vmem:[%s3 + $0x18] sm:$0xff]
          %v671 = vld [vmem:[%s3 + $0x20] sm:$0xff]
          %v672 = vld [vmem:[%s3 + $0x28] sm:$0xff]
          %v673 = vld [vmem:[%s3 + $0x30] sm:$0xff]
          %v674 = vld [vmem:[%s3 + $0x38] sm:$0xff]
          %v675 = vld [vmem:[%s3 + $0x40] sm:$0xff]
          %v676 = vld [vmem:[%s3 + $0x48] sm:$0xff]
          %v677 = vld [vmem:[%s3 + $0x50] sm:$0xff]
          %v678 = vld [vmem:[%s3 + $0x58] sm:$0xff]
          %v679 = vld [vmem:[%s3 + $0x60] sm:$0xff]
          %v680 = vld [vmem:[%s3 + $0x68] sm:$0xff]
          %v681 = vld [vmem:[%s3 + $0x70] sm:$0xff]
          %v682 = vld [vmem:[%s3 + $0x78] sm:$0xff]
          %v683 = vld [vmem:[%s477] sm:$0x3]
          %v684 = vld [vmem:[%s4] sm:$0xff]
          %v685 = vld [vmem:[%s4 + $0x8] sm:$0xff]
          %vm686 = vcmask 130048
          %v688 = vsel %vm686, %v683, 0
          %690 = vmatpush.msra.mxu0 0.0
          %691 = vmatpush.msra.mxu0 0.0
          %692 = vmatpush.msra.mxu0 0.0
          %693 = vmatpush.msra.mxu0 0.0
          %694 = vmatpush.msra.mxu0 0.0
          %695 = vmatpush.msra.mxu0 0.0
          %696 = vmatpush.msra.mxu0 0.0
          %697 = vmatpush.msra.mxu0 0.0
          %698 = vmatpush.msra.mxu0 0.0
          %699 = vmatpush.msra.mxu0 0.0
          %700 = vmatpush.msra.mxu0 0.0
          %701 = vmatpush.msra.mxu0 0.0
          %702 = vmatpush.msra.mxu0 0.0
          %703 = vmatpush.msra.mxu0 0.0
          %704 = vmatpush.msra.mxu0 %v685
          %705 = vmatpush.msra.mxu0 %v684
          %706 = vmatmul.f32.gmra.mxu0 %v688
          %v707 = vpop.f32.mrf.mxu0
          %v708 = vadd.f32 0.0, %v707
          %709 = vdwg.mxu0
          %712 = vst [vmem:[#allocation1] ss:$9 sm:$0xff] %v665
          %s713 = scalar_lea.vmem [#allocation1], 1
          %714 = vst [vmem:[%s713] ss:$9 sm:$0xff] %v666
          %v715 = vld [vmem:[#allocation1] sm:$0xff]
          %717 = vmatpush.msra.mxu0 %v682
          %718 = vmatpush.msra.mxu0 %v681
          %719 = vmatpush.msra.mxu0 %v680
          %720 = vmatpush.msra.mxu0 %v679
          %721 = vmatpush.msra.mxu0 %v678
          %722 = vmatpush.msra.mxu0 %v677
          %723 = vmatpush.msra.mxu0 %v676
          %724 = vmatpush.msra.mxu0 %v675
          %725 = vmatpush.msra.mxu0 %v674
          %726 = vmatpush.msra.mxu0 %v673
          %727 = vmatpush.msra.mxu0 %v672
          %728 = vmatpush.msra.mxu0 %v671
          %729 = vmatpush.msra.mxu0 %v670
          %730 = vmatpush.msra.mxu0 %v669
          %731 = vmatpush.msra.mxu0 %v668
          %732 = vmatpush.msra.mxu0 %v667
          %733 = vmatmul.f32.gmra.mxu0 %v715
          %v734 = vpop.f32.mrf.mxu0
          %v735 = vadd.f32 %v708, %v734
          %736 = vdwg.mxu0
          %v737 = vld [vmem:[%s5] sm:$0x1]
          %v739 = vperm.slane %v737, 0
          %v741 = vadd.f32 %v735, %v739
          %742 = vst [vmem:[#allocation4] sm:$0x3] %v741
        $region93: #{bert_emo_head.1} parent=80 // pred_fallthru
          _
        // Predicated region
        $region94: #{bert_emo_head.1} parent=80 // pred_check
          %p743 = pneg %p193
        $region95: #{bert_emo_head.1} parent=80 // pred_check_branch
          %745 = sbr.rel (%p743) target = $region97
        $region96: #{bert_emo_head.1} parent=80 // pred_region
          %747 = vsyncadd [#allocation5], 0
          %s748 = smul.addr %s22, 2
          %s749 = scalar_lea.hbm %s6, %s748
          %s751 = sshll.u32 [#allocation4], 4
          %s752 = int_to_ptr.vmem [resolvable:$true] %s751
          %s753 = sshll.u32 %s749, 4
          %s754 = int_to_ptr.hbm [resolvable:$true] %s753
          %756 = dma.vmem_to_hbm [thread:$0]  %s752, 32, %s754, [#allocation5]
        $region97: #{bert_emo_head.1} parent=80 // pred_fallthru
          _
        // Predicated region
        $region98: #{bert_emo_head.1} parent=80 // pred_check
          %p757 = pneg %p193
        $region99: #{bert_emo_head.1} parent=80 // pred_check_branch
          %759 = sbr.rel (%p757) target = $region101
        $region100: #{bert_emo_head.1} parent=80 // pred_region
          %761 = dma.done [#allocation5], 32
        $region101: #{bert_emo_head.1} parent=80 // pred_fallthru
          _
      $region81: #{bert_emo_head.1} parent=5 // pred_fallthru
        _
      %p762 = scmp.le.s32.totalorder 2, %s13
      // Predicated region
      $region102: #{bert_emo_head.1} parent=5 // pred_check
        %p763 = pneg %p762
      $region103: #{bert_emo_head.1} parent=5 // pred_check_branch
        %765 = sbr.rel (%p763) target = $region105
      $region104: #{bert_emo_head.1} parent=5 // pred_region
        %s766 = ssub.s32 %s13, 2
      $region105: #{bert_emo_head.1} parent=5 // pred_fallthru
        _
    $region6: #{bert_emo_head.1} parent=1 // loop_footer
      %s17 = sadd.s32 1, %s13
    $region7: #{bert_emo_head.1} parent=1 // loop_footer_branch
      %12 = sbr.rel target = $region3
    $region8: #{bert_emo_head.1} parent=1 // loop_exit
      _
    %767 = vsyncpa [#allocation5], 1
    %s768 = scalar_lea.sflag [#allocation5], 1
    %769 = vsyncpa %s768, 1

</llo_original>
